<compile_context>
chip_gen: v7x
topology: tpu7x:2x2x1
jax: 0.10.0
libtpu: 0.0.40
codegen_flags: <defaults>
</compile_context>

<pallas_src>
import functools

import jax
import jax.numpy as jnp
from jax import lax
from jax.experimental import pallas as pl
from jax.experimental.pallas import tpu as pltpu

EPS = 10.0 ** (-9)
LANE = 128
ACC_ROWS = 8                        # one f32 vreg of sublanes per accumulator
_VMEM_LIMIT = 32 * 1024 * 1024      # == v6e/v7x scoped default; explicit raise for v5e (16 MiB)


def _wcce_kernel(pred_ref, true_ref, sum_true_ref, sum_tlogp_ref, *,
                 mt_total, tm, acc_rows, apply_mask):
    """One (c, b, m) grid step: fold a (tm, 128) slab into the resident (acc_rows, 128)
    per-(c, b) output accumulators (lane-wise partial sums)."""
    m = pl.program_id(2)

    # First m-step of every (c, b): zero the resident output accumulators.
    @pl.when(m == 0)
    def _():
        sum_true_ref[...] = jnp.zeros_like(sum_true_ref)
        sum_tlogp_ref[...] = jnp.zeros_like(sum_tlogp_ref)

    t = true_ref[...].astype(jnp.float32)           # (tm, 128), upcast from native width
    p = pred_ref[...].astype(jnp.float32)           # (tm, 128)
    contrib = t * jnp.log(p + EPS)                  # VPU muls/adds + one EUP log per element

    if apply_mask:
        # Compiled in only when Mt % tm != 0: rows past the array end hold garbage.  Mask the
        # final contribution (and t for the weight sums) — two selects, nothing else.
        rem = mt_total - m * tm                     # rows still valid in this block
        row = lax.broadcasted_iota(jnp.int32, (tm, LANE), 0)
        valid = row < rem
        t = jnp.where(valid, t, 0.0)
        contrib = jnp.where(valid, contrib, 0.0)

    if acc_rows != tm:
        # Row-group reduce (tm,128) -> (acc_rows,128).  The reshape is (8,128)-tile preserving
        # and the axis-0 sum is cross-vreg VPU adds, so the accumulator RMW below only touches
        # acc_rows rows instead of tm rows (relieves vld/vst slots on v7x, shrinks VMEM).
        t = jnp.sum(t.reshape(tm // acc_rows, acc_rows, LANE), axis=0)
        contrib = jnp.sum(contrib.reshape(tm // acc_rows, acc_rows, LANE), axis=0)

    sum_true_ref[...] += t
    sum_tlogp_ref[...] += contrib


def _pick_tm(mt, tm_max, sublane):
    """Choose block rows: (a) full Mt if it fits, (b) largest multiple-of-`sublane` divisor of Mt
    in [min(512, tm_max), tm_max] (clean, no mask), else (c) a masked tm_max-sized block."""
    if mt <= tm_max:
        return mt, False
    lo = min(512, tm_max)                           # don't accept tiny clean divisors
    hi = tm_max - tm_max % sublane
    for cand in range(hi, lo - 1, -sublane):
        if mt % cand == 0:
            return cand, False
    return max(hi, sublane), True


def _channel_sums(pred4, true4, *, tm_max=4096):
    """pred4, true4: (B, C, Mt, 128), any float (pred) / float-or-int (true) element type.
    Returns two (C,) f32 arrays: sum_n true[c,n] and sum_n true[c,n] * log(pred[c,n] + EPS)."""
    B, C, Mt, lane = pred4.shape
    assert lane == LANE and true4.shape == pred4.shape

    itemsize = max(1, min(4, pred4.dtype.itemsize, true4.dtype.itemsize))
    sublane = 8 * (4 // itemsize)                   # packed-dtype sublane granularity: 8/16/32
    tm, apply_mask = _pick_tm(Mt, tm_max, sublane)
    nm = pl.cdiv(Mt, tm)
    acc_rows = ACC_ROWS if tm % ACC_ROWS == 0 else tm

    kernel = functools.partial(_wcce_kernel, mt_total=Mt, tm=tm,
                               acc_rows=acc_rows, apply_mask=apply_mask)
    in_spec = pl.BlockSpec((None, None, tm, LANE), lambda c, b, m: (b, c, m, 0))
    out_spec = pl.BlockSpec((None, None, acc_rows, LANE), lambda c, b, m: (c, b, 0, 0))

    sum_true, sum_tlogp = pl.pallas_call(
        kernel,
        out_shape=(
            jax.ShapeDtypeStruct((C, B, acc_rows, LANE), jnp.float32),
            jax.ShapeDtypeStruct((C, B, acc_rows, LANE), jnp.float32),
        ),
        grid=(C, B, nm),
        in_specs=[in_spec, in_spec],
        out_specs=(out_spec, out_spec),
        compiler_params=pltpu.CompilerParams(
            dimension_semantics=("parallel", "parallel", "arbitrary"),
            vmem_limit_bytes=_VMEM_LIMIT),
    )(pred4, true4)

    # Tiny final reduce (C * B * acc_rows * 128 elements) in plain JAX glue.
    return (jnp.sum(sum_true, axis=(1, 2, 3)),
            jnp.sum(sum_tlogp, axis=(1, 2, 3)))


@functools.partial(jax.jit, static_argnames=("weighted",))
def weighted_categorical_cross_entropy(pred, true, *, weighted=False):
    """pred, true: (B, C, D, H, W), one-hot-style `true`.  Inputs may be f32/bf16 (pred) and
    f32/bf16/int (true); they are streamed at native width and upcast in-kernel.  Scalar f32."""
    B, C, D, H, W = pred.shape
    M = D * H * W
    N = B * M

    pad = (-M) % LANE
    if pad == 0:
        pred4 = pred.reshape(B, C, M // LANE, LANE)   # free reshape, no data movement
        true4 = true.reshape(B, C, M // LANE, LANE)
    else:
        # TODO(synk): spatial volumes not divisible by 128 take one extra pad pass here; a
        # flat-(B,C,M) kernel variant with an in-kernel lane mask on the last block would remove it.
        pred4 = jnp.pad(pred.reshape(B, C, M), ((0, 0), (0, 0), (0, pad)),
                        constant_values=1).reshape(B, C, -1, LANE)
        true4 = jnp.pad(true.reshape(B, C, M), ((0, 0), (0, 0), (0, pad)),
                        constant_values=0).reshape(B, C, -1, LANE)

    sum_true_c, sum_tlogp_c = _channel_sums(pred4, true4)

    # Tiny O(C) weight computation (matches the torch semantics exactly).
    if weighted:
        result = sum_true_c                       # torch.sum(true, dim=[0,2,3,4]) -> (C,)
    else:
        result = jnp.sum(sum_true_c)              # torch.sum(true)                -> scalar
    result_f = jnp.power(result, 1.0 / 3.0)
    weight = result_f / jnp.sum(result_f)         # (C,) or scalar (== 1.0)
    inv_w = 1.0 / (weight + EPS)

    total = jnp.sum(inv_w * sum_tlogp_c)          # broadcasts for both scalar/(C,) cases
    return -total / N                             # .mean() over (B, D, H, W)


def _reference(pred, true, weighted):
    """Pure-JAX transcription of the PyTorch forward (f32 math), for validation."""
    pred = pred.astype(jnp.float32)
    true = true.astype(jnp.float32)
    if weighted:
        result = jnp.sum(true, axis=(0, 2, 3, 4))
    else:
        result = jnp.sum(true)
    result_f = jnp.power(result, 1.0 / 3.0)
    weight = result_f / jnp.sum(result_f)
    if weighted:
        weight = weight[None, :, None, None, None]
    out = -1.0 * jnp.sum(1.0 / (weight + EPS) * true * jnp.log(pred + EPS), axis=1)
    return out.mean()


if __name__ == "__main__":
    key = jax.random.PRNGKey(0)
    ok = True

    # Main check: small UNet-like volume, NCDHW one-hot inputs, both weighting modes.
    B, C, D, H, W = 2, 4, 8, 16, 16                   # D*H*W = 2048 -> Mt = 16
    k1, k2, k3, k4 = jax.random.split(key, 4)
    pred = jax.nn.softmax(jax.random.normal(k1, (B, C, D, H, W), jnp.float32), axis=1)
    labels = jax.random.randint(k2, (B, D, H, W), 0, C)
    true = jnp.transpose(jax.nn.one_hot(labels, C, dtype=jnp.float32), (0, 4, 1, 2, 3))

    for weighted in (False, True):
        loss = jax.block_until_ready(
            weighted_categorical_cross_entropy(pred, true, weighted=weighted))
        ref = _reference(pred, true, weighted)
        if not jnp.allclose(loss, ref, rtol=1e-5, atol=1e-5):
            ok = False
            print(f"MISMATCH f32 weighted={weighted}: kernel={loss} ref={ref}")

    # Narrow-dtype path: bf16 inputs streamed at native width, upcast to f32 in-kernel.
    pred_bf, true_bf = pred.astype(jnp.bfloat16), true.astype(jnp.bfloat16)
    loss_bf = jax.block_until_ready(
        weighted_categorical_cross_entropy(pred_bf, true_bf, weighted=True))
    ref_bf = _reference(pred_bf, true_bf, True)
    if not jnp.allclose(loss_bf, ref_bf, rtol=1e-4, atol=1e-4):
        ok = False
        print(f"MISMATCH bf16: kernel={loss_bf} ref={ref_bf}")

    # Ragged-Mt in-kernel mask path (Mt=24 streamed as two tm=16 blocks, last block masked).
    Bs, Cs, Mts = 1, 3, 24
    p4 = jax.random.uniform(k3, (Bs, Cs, Mts, LANE), jnp.float32, 0.05, 1.0)
    t4 = jax.random.uniform(k4, (Bs, Cs, Mts, LANE), jnp.float32, 0.0, 1.0)
    st, sl = _channel_sums(p4, t4, tm_max=16)
    st = jax.block_until_ready(st)
    st_ref = jnp.sum(t4, axis=(0, 2, 3))
    sl_ref = jnp.sum(t4 * jnp.log(p4 + EPS), axis=(0, 2, 3))
    if not (jnp.allclose(st, st_ref, rtol=1e-4, atol=1e-3)
            and jnp.allclose(sl, sl_ref, rtol=1e-4, atol=1e-3)):
        ok = False
        print("MISMATCH ragged-mask path:", st, st_ref, sl, sl_ref)

    # Non-multiple-of-8 full-Mt block (acc_rows == tm, no row-group fold).
    Mtt = 12
    p5 = jax.random.uniform(k3, (2, 2, Mtt, LANE), jnp.float32, 0.05, 1.0)
    t5 = jax.random.uniform(k4, (2, 2, Mtt, LANE), jnp.float32, 0.0, 1.0)
    st5, sl5 = _channel_sums(p5, t5)
    st5 = jax.block_until_ready(st5)
    if not (jnp.allclose(st5, jnp.sum(t5, axis=(0, 2, 3)), rtol=1e-4, atol=1e-3)
            and jnp.allclose(sl5, jnp.sum(t5 * jnp.log(p5 + EPS), axis=(0, 2, 3)),
                             rtol=1e-4, atol=1e-3)):
        ok = False
        print("MISMATCH full-block (acc_rows==tm) path")

    if ok:
        print("KERNEL_OK")
</pallas_src>

<mosaic_0001>
module attributes {stable_mosaic.version = 11 : i64} {
  func.func @_wcce_kernel(%arg0: i32, %arg1: i32, %arg2: i32, %arg3: memref<1x1x16x128xf32, #tpu.memory_space<vmem>>, %arg4: memref<1x1x16x128xf32, #tpu.memory_space<vmem>>, %arg5: memref<1x1x8x128xf32, #tpu.memory_space<vmem>>, %arg6: memref<1x1x8x128xf32, #tpu.memory_space<vmem>>) attributes {dimension_semantics = [#tpu.dimension_semantics<parallel>, #tpu.dimension_semantics<parallel>, #tpu.dimension_semantics<arbitrary>], iteration_bounds = array<i64: 4, 2, 1>, scalar_prefetch = 0 : i64, scratch_operands = 0 : i64, tpu.core_type = #tpu.core_type<tc>, window_params = [{transform_indices = @transform_0, window_bounds = array<i64: 1, 1, 16, 128>}, {transform_indices = @transform_1, window_bounds = array<i64: 1, 1, 16, 128>}, {transform_indices = @transform_2, window_bounds = array<i64: 1, 1, 8, 128>}, {transform_indices = @transform_3, window_bounds = array<i64: 1, 1, 8, 128>}]} {
    %c0_i32 = arith.constant 0 : i32
    %0 = arith.cmpi eq, %arg2, %c0_i32 : i32
    %1 = arith.extui %0 : i1 to i32
    %c0_i32_0 = arith.constant 0 : i32
    %2 = arith.cmpi ne, %1, %c0_i32_0 : i32
    scf.if %2 {
      %cst_26 = arith.constant 0.000000e+00 : f32
      %27 = vector.broadcast %cst_26 : f32 to vector<8x128xf32>
      %c0_27 = arith.constant 0 : index
      %c0_28 = arith.constant 0 : index
      %c0_29 = arith.constant 0 : index
      %c0_30 = arith.constant 0 : index
      %28 = vector.load %arg5[%c0_27, %c0_28, %c0_29, %c0_30] : memref<1x1x8x128xf32, #tpu.memory_space<vmem>>, vector<1x1x8x128xf32>
      %29 = vector.shape_cast %28 : vector<1x1x8x128xf32> to vector<8x128xf32>
      %30 = vector.shape_cast %27 : vector<8x128xf32> to vector<1x1x8x128xf32>
      tpu.vector_store %arg5[%c0_27, %c0_28, %c0_29, %c0_30], %30 {strides = array<i32>} : memref<1x1x8x128xf32, #tpu.memory_space<vmem>>, vector<1x1x8x128xf32>,
      %cst_31 = arith.constant 0.000000e+00 : f32
      %31 = vector.broadcast %cst_31 : f32 to vector<8x128xf32>
      %c0_32 = arith.constant 0 : index
      %c0_33 = arith.constant 0 : index
      %c0_34 = arith.constant 0 : index
      %c0_35 = arith.constant 0 : index
      %32 = vector.load %arg6[%c0_32, %c0_33, %c0_34, %c0_35] : memref<1x1x8x128xf32, #tpu.memory_space<vmem>>, vector<1x1x8x128xf32>
      %33 = vector.shape_cast %32 : vector<1x1x8x128xf32> to vector<8x128xf32>
      %34 = vector.shape_cast %31 : vector<8x128xf32> to vector<1x1x8x128xf32>
      tpu.vector_store %arg6[%c0_32, %c0_33, %c0_34, %c0_35], %34 {strides = array<i32>} : memref<1x1x8x128xf32, #tpu.memory_space<vmem>>, vector<1x1x8x128xf32>,
    } else {
    }
    %c0 = arith.constant 0 : index
    %c0_1 = arith.constant 0 : index
    %c0_2 = arith.constant 0 : index
    %c0_3 = arith.constant 0 : index
    %3 = vector.load %arg4[%c0, %c0_1, %c0_2, %c0_3] : memref<1x1x16x128xf32, #tpu.memory_space<vmem>>, vector<1x1x16x128xf32>
    %4 = vector.shape_cast %3 : vector<1x1x16x128xf32> to vector<16x128xf32>
    %c0_4 = arith.constant 0 : index
    %c0_5 = arith.constant 0 : index
    %c0_6 = arith.constant 0 : index
    %c0_7 = arith.constant 0 : index
    %5 = vector.load %arg3[%c0_4, %c0_5, %c0_6, %c0_7] : memref<1x1x16x128xf32, #tpu.memory_space<vmem>>, vector<1x1x16x128xf32>
    %6 = vector.shape_cast %5 : vector<1x1x16x128xf32> to vector<16x128xf32>
    %cst = arith.constant 9.99999971E-10 : f32
    %7 = vector.broadcast %cst : f32 to vector<16x128xf32>
    %8 = arith.addf %6, %7 : vector<16x128xf32>
    %9 = math.log %8 : vector<16x128xf32>
    %10 = arith.mulf %4, %9 : vector<16x128xf32>
    %11 = vector.shape_cast %4 : vector<16x128xf32> to vector<2x8x128xf32>
    %cst_8 = arith.constant dense<0.000000e+00> : vector<8x128xf32>
    %12 = vector.multi_reduction <add>, %11, %cst_8 [0] : vector<2x8x128xf32> to vector<8x128xf32>
    %13 = vector.shape_cast %10 : vector<16x128xf32> to vector<2x8x128xf32>
    %cst_9 = arith.constant dense<0.000000e+00> : vector<8x128xf32>
    %14 = vector.multi_reduction <add>, %13, %cst_9 [0] : vector<2x8x128xf32> to vector<8x128xf32>
    %c0_10 = arith.constant 0 : index
    %c0_11 = arith.constant 0 : index
    %c0_12 = arith.constant 0 : index
    %c0_13 = arith.constant 0 : index
    %15 = vector.load %arg5[%c0_10, %c0_11, %c0_12, %c0_13] : memref<1x1x8x128xf32, #tpu.memory_space<vmem>>, vector<1x1x8x128xf32>
    %16 = vector.shape_cast %15 : vector<1x1x8x128xf32> to vector<8x128xf32>
    %17 = arith.addf %16, %12 : vector<8x128xf32>
    %c0_14 = arith.constant 0 : index
    %c0_15 = arith.constant 0 : index
    %c0_16 = arith.constant 0 : index
    %c0_17 = arith.constant 0 : index
    %18 = vector.load %arg5[%c0_14, %c0_15, %c0_16, %c0_17] : memref<1x1x8x128xf32, #tpu.memory_space<vmem>>, vector<1x1x8x128xf32>
    %19 = vector.shape_cast %18 : vector<1x1x8x128xf32> to vector<8x128xf32>
    %20 = vector.shape_cast %17 : vector<8x128xf32> to vector<1x1x8x128xf32>
    tpu.vector_store %arg5[%c0_14, %c0_15, %c0_16, %c0_17], %20 {strides = array<i32>} : memref<1x1x8x128xf32, #tpu.memory_space<vmem>>, vector<1x1x8x128xf32>,
    %c0_18 = arith.constant 0 : index
    %c0_19 = arith.constant 0 : index
    %c0_20 = arith.constant 0 : index
    %c0_21 = arith.constant 0 : index
    %21 = vector.load %arg6[%c0_18, %c0_19, %c0_20, %c0_21] : memref<1x1x8x128xf32, #tpu.memory_space<vmem>>, vector<1x1x8x128xf32>
    %22 = vector.shape_cast %21 : vector<1x1x8x128xf32> to vector<8x128xf32>
    %23 = arith.addf %22, %14 : vector<8x128xf32>
    %c0_22 = arith.constant 0 : index
    %c0_23 = arith.constant 0 : index
    %c0_24 = arith.constant 0 : index
    %c0_25 = arith.constant 0 : index
    %24 = vector.load %arg6[%c0_22, %c0_23, %c0_24, %c0_25] : memref<1x1x8x128xf32, #tpu.memory_space<vmem>>, vector<1x1x8x128xf32>
    %25 = vector.shape_cast %24 : vector<1x1x8x128xf32> to vector<8x128xf32>
    %26 = vector.shape_cast %23 : vector<8x128xf32> to vector<1x1x8x128xf32>
    tpu.vector_store %arg6[%c0_22, %c0_23, %c0_24, %c0_25], %26 {strides = array<i32>} : memref<1x1x8x128xf32, #tpu.memory_space<vmem>>, vector<1x1x8x128xf32>,
    return
  }
  func.func @transform_0(%arg0: i32, %arg1: i32, %arg2: i32) -> (i32, i32, i32, i32) {
    %c0_i32 = arith.constant 0 : i32
    %c0_i32_0 = arith.constant 0 : i32
    return %arg1, %arg0, %arg2, %c0_i32 : i32, i32, i32, i32
  }
  func.func @transform_1(%arg0: i32, %arg1: i32, %arg2: i32) -> (i32, i32, i32, i32) {
    %c0_i32 = arith.constant 0 : i32
    %c0_i32_0 = arith.constant 0 : i32
    return %arg1, %arg0, %arg2, %c0_i32 : i32, i32, i32, i32
  }
  func.func @transform_2(%arg0: i32, %arg1: i32, %arg2: i32) -> (i32, i32, i32, i32) {
    %c0_i32 = arith.constant 0 : i32
    %c0_i32_0 = arith.constant 0 : i32
    %c0_i32_1 = arith.constant 0 : i32
    return %arg0, %arg1, %c0_i32, %c0_i32_0 : i32, i32, i32, i32
  }
  func.func @transform_3(%arg0: i32, %arg1: i32, %arg2: i32) -> (i32, i32, i32, i32) {
    %c0_i32 = arith.constant 0 : i32
    %c0_i32_0 = arith.constant 0 : i32
    %c0_i32_1 = arith.constant 0 : i32
    return %arg0, %arg1, %c0_i32, %c0_i32_0 : i32, i32, i32, i32
  }
}

</mosaic_0001>

<llo_original>
// kernel: weighted_categorical_cross_entropy.1
$region0: #{weighted_categorical_cross_entropy.1}
  #allocation0 [shape = 'u32[]', space=smem, size = 0x4, offset = 0x4, fixed_abs, tag = 'smem constant byte address 0x4 - core index']
  #allocation1 [shape = 'u32[144,128]{1,0:T(1,128)}', space=vmem, size = 0x12000, scoped, tag = 'internal scratch']
  %s0 = inlined_call_operand.vmem [shape: f32[2,4,16,128], index: 0, kind: input, shape index: {}]
  %s1 = inlined_call_operand.vmem [shape: f32[2,4,16,128], index: 1, kind: input, shape index: {}]
  %s2 = inlined_call_operand.vmem [shape: f32[4,2,8,128], index: 2, kind: output, shape index: {0}]
  %s3 = inlined_call_operand.vmem [shape: f32[4,2,8,128], index: 3, kind: output, shape index: {1}]
  %4 = xla_tuple %s2, %s3
  %s5 = sld [smem:[#allocation0]]
  $region53: #{weighted_categorical_cross_entropy.1} parent=0
    _
  %s7 = ssub.s32 1, %s5
  %s8 = scalar_select 0, %s7, %s5
  loop: start=0, step=1, limit=10
  $region2: #{weighted_categorical_cross_entropy.1} parent=0 // loop_pre_header
    _
  $region3: #{weighted_categorical_cross_entropy.1} parent=0 // loop_header
    %s10 = sphi 0, %s14
    %p11 = scmp.ge.s32.totalorder %s10, 10
    %s17 = sphi 0, %s36
    %s18 = sphi 0, %s32
    %s19 = sphi 0, %s28
    %s20 = sphi 0, %s17
    %s21 = sphi 0, %s18
    %s22 = sphi 0, %s19
    %s23 = sphi 0, %s20
    %s24 = sphi 0, %s21
    %s25 = sphi 0, %s22
    %s43 = sphi 0, %s45
    %s46 = sphi 0, %s43
    %s47 = sphi 0, %s46
    %s63 = sphi 0, %s47
    %s73 = sphi 0, %s75
    %s76 = sphi 0, %s73
    %s77 = sphi 0, %s76
    %s93 = sphi 0, %s77
    %s101 = sphi 0, %s103
    %s104 = sphi 0, %s101
    %s105 = sphi 0, %s104
    %s121 = sphi 0, %s105
    %s129 = sphi 0, %s131
    %s132 = sphi 0, %s129
    %s133 = sphi 0, %s132
    %s149 = sphi 0, %s133
  $region4: #{weighted_categorical_cross_entropy.1} parent=0 // loop_header_branch
    %13 = sbr.rel (%p11) target = $region8
  $region5: #{weighted_categorical_cross_entropy.1} parent=0 // loop_body
    %s15 = ssub.s32 %s10, 1
    %s16 = ssub.s32 %s10, 2
    %s26 = sadd.s32 1, %s19
    %p27 = scmp.ge.s32.totalorder %s26, 1
    %s28 = scalar_select %p27, 0, %s26
    %s29 = sadd.s32 1, %s18
    %s30 = scalar_select %p27, %s29, %s18
    %p31 = scmp.ge.s32.totalorder %s30, 2
    %s32 = scalar_select %p31, 0, %s30
    %s33 = sadd.s32 1, %s17
    %s34 = scalar_select %p31, %s33, %s17
    %p35 = scmp.ge.s32.totalorder %s34, 4
    %s36 = scalar_select %p35, 0, %s34
    %s37 = ssub.s32 %s18, %s32
    %s38 = ssub.s32 %s17, %s36
    %s39 = sor.u32 %s37, %s38
    %s40 = ssub.s32 %s19, %s28
    %s41 = sor.u32 %s39, %s40
    %p42 = scmp.eq.s32.totalorder %s41, 0
    %s44 = sadd.s32 %s43, 1
    %s45 = scalar_select %p42, %s43, %s44
    %p48 = pneg %p42
    %p49 = scmp.eq.s32.totalorder %s10, 7
    %p50 = por %p48, %p49
    %p51 = scmp.ne.s32.totalorder %s43, %s46
    %p52 = scmp.eq.s32.totalorder %s10, 0
    %p53 = por %p51, %p52
    %p54 = scmp.ne.s32.totalorder %s43, %s46
    %p55 = scmp.eq.s32.totalorder %s15, 7
    %p56 = por %p54, %p55
    %p57 = scmp.ne.s32.totalorder %s46, %s47
    %p58 = scmp.eq.s32.totalorder %s15, 0
    %p59 = por %p57, %p58
    %p60 = scmp.ne.s32.totalorder %s46, %s47
    %p61 = scmp.eq.s32.totalorder %s16, 7
    %p62 = por %p60, %p61
    %p64 = scmp.ne.s32.totalorder %s47, %s63
    %p65 = scmp.eq.s32.totalorder %s16, 0
    %p66 = por %p64, %p65
    %s67 = ssub.s32 %s18, %s32
    %s68 = ssub.s32 %s17, %s36
    %s69 = sor.u32 %s67, %s68
    %s70 = ssub.s32 %s19, %s28
    %s71 = sor.u32 %s69, %s70
    %p72 = scmp.eq.s32.totalorder %s71, 0
    %s74 = sadd.s32 %s73, 1
    %s75 = scalar_select %p72, %s73, %s74
    %p78 = pneg %p72
    %p79 = scmp.eq.s32.totalorder %s10, 7
    %p80 = por %p78, %p79
    %p81 = scmp.ne.s32.totalorder %s73, %s76
    %p82 = scmp.eq.s32.totalorder %s10, 0
    %p83 = por %p81, %p82
    %p84 = scmp.ne.s32.totalorder %s73, %s76
    %p85 = scmp.eq.s32.totalorder %s15, 7
    %p86 = por %p84, %p85
    %p87 = scmp.ne.s32.totalorder %s76, %s77
    %p88 = scmp.eq.s32.totalorder %s15, 0
    %p89 = por %p87, %p88
    %p90 = scmp.ne.s32.totalorder %s76, %s77
    %p91 = scmp.eq.s32.totalorder %s16, 7
    %p92 = por %p90, %p91
    %p94 = scmp.ne.s32.totalorder %s77, %s93
    %p95 = scmp.eq.s32.totalorder %s16, 0
    %p96 = por %p94, %p95
    %s97 = ssub.s32 %s17, %s36
    %s98 = ssub.s32 %s18, %s32
    %s99 = sor.u32 %s97, %s98
    %p100 = scmp.eq.s32.totalorder %s99, 0
    %s102 = sadd.s32 %s101, 1
    %s103 = scalar_select %p100, %s101, %s102
    %p106 = pneg %p100
    %p107 = scmp.eq.s32.totalorder %s10, 7
    %p108 = por %p106, %p107
    %p109 = scmp.ne.s32.totalorder %s101, %s104
    %p110 = scmp.eq.s32.totalorder %s10, 0
    %p111 = por %p109, %p110
    %p112 = scmp.ne.s32.totalorder %s101, %s104
    %p113 = scmp.eq.s32.totalorder %s15, 7
    %p114 = por %p112, %p113
    %p115 = scmp.ne.s32.totalorder %s104, %s105
    %p116 = scmp.eq.s32.totalorder %s15, 0
    %p117 = por %p115, %p116
    %p118 = scmp.ne.s32.totalorder %s104, %s105
    %p119 = scmp.eq.s32.totalorder %s16, 7
    %p120 = por %p118, %p119
    %p122 = scmp.ne.s32.totalorder %s105, %s121
    %p123 = scmp.eq.s32.totalorder %s16, 0
    %p124 = por %p122, %p123
    %s125 = ssub.s32 %s17, %s36
    %s126 = ssub.s32 %s18, %s32
    %s127 = sor.u32 %s125, %s126
    %p128 = scmp.eq.s32.totalorder %s127, 0
    %s130 = sadd.s32 %s129, 1
    %s131 = scalar_select %p128, %s129, %s130
    %p134 = pneg %p128
    %p135 = scmp.eq.s32.totalorder %s10, 7
    %p136 = por %p134, %p135
    %p137 = scmp.ne.s32.totalorder %s129, %s132
    %p138 = scmp.eq.s32.totalorder %s10, 0
    %p139 = por %p137, %p138
    %p140 = scmp.ne.s32.totalorder %s129, %s132
    %p141 = scmp.eq.s32.totalorder %s15, 7
    %p142 = por %p140, %p141
    %p143 = scmp.ne.s32.totalorder %s132, %s133
    %p144 = scmp.eq.s32.totalorder %s15, 0
    %p145 = por %p143, %p144
    %p146 = scmp.ne.s32.totalorder %s132, %s133
    %p147 = scmp.eq.s32.totalorder %s16, 7
    %p148 = por %p146, %p147
    %p150 = scmp.ne.s32.totalorder %s133, %s149
    %p151 = scmp.eq.s32.totalorder %s16, 0
    %p152 = por %p150, %p151
    %p153 = scmp.le.s32.totalorder 1, %s10
    %p154 = scmp.lt.s32.totalorder %s10, 9
    %p155 = pnand %p153, %p154
    %p156 = pneg %p155
    // Predicated region
    $region9: #{weighted_categorical_cross_entropy.1} parent=5 // pred_check
      _
    $region10: #{weighted_categorical_cross_entropy.1} parent=5 // pred_check_branch
      %158 = sbr.rel (%p155) target = $region12
    $region11: #{weighted_categorical_cross_entropy.1} parent=5 // pred_region
      %s159 = ssub.s32 %s10, 1
    $region12: #{weighted_categorical_cross_entropy.1} parent=5 // pred_fallthru
      _
    %p160 = scmp.lt.s32.totalorder %s10, 8
    // Predicated region
    $region13: #{weighted_categorical_cross_entropy.1} parent=5 // pred_check
      %p161 = pneg %p160
    $region14: #{weighted_categorical_cross_entropy.1} parent=5 // pred_check_branch
      %163 = sbr.rel (%p161) target = $region16
    $region15: #{weighted_categorical_cross_entropy.1} parent=5 // pred_region
      // Predicated region
      $region17: #{weighted_categorical_cross_entropy.1} parent=15 // pred_check
        %p164 = pneg %p53
      $region18: #{weighted_categorical_cross_entropy.1} parent=15 // pred_check_branch
        %166 = sbr.rel (%p164) target = $region20
      $region19: #{weighted_categorical_cross_entropy.1} parent=15 // pred_region
        %s167 = smul.u32 2, %s19
        %p168 = scmp.lt.s32.totalorder %s18, 1
        %s169 = scalar_select %p168, %s18, 1
        %p170 = scmp.lt.s32.totalorder %s17, 3
        %s171 = scalar_select %p170, %s17, 3
        %p172 = scmp.lt.s32.totalorder %s167, 1
        %s173 = scalar_select %p172, %s167, 1
        %s174 = smul.addr %s171, 2
        %s175 = sadd.s32 %s173, %s174
        %s176 = smul.addr %s169, 8
        %s177 = sadd.s32 %s175, %s176
        %s178 = smul.addr %s177, 8
        %s179 = scalar_lea.vmem %s0, %s178
        %s180 = smul.u32 2, %s19
      $region20: #{weighted_categorical_cross_entropy.1} parent=15 // pred_fallthru
        _
      // Predicated region
      $region21: #{weighted_categorical_cross_entropy.1} parent=15 // pred_check
        %p181 = pneg %p83
      $region22: #{weighted_categorical_cross_entropy.1} parent=15 // pred_check_branch
        %183 = sbr.rel (%p181) target = $region24
      $region23: #{weighted_categorical_cross_entropy.1} parent=15 // pred_region
        %s184 = smul.u32 2, %s19
        %p185 = scmp.lt.s32.totalorder %s18, 1
        %s186 = scalar_select %p185, %s18, 1
        %p187 = scmp.lt.s32.totalorder %s17, 3
        %s188 = scalar_select %p187, %s17, 3
        %p189 = scmp.lt.s32.totalorder %s184, 1
        %s190 = scalar_select %p189, %s184, 1
        %s191 = smul.addr %s188, 2
        %s192 = sadd.s32 %s190, %s191
        %s193 = smul.addr %s186, 8
        %s194 = sadd.s32 %s192, %s193
        %s195 = smul.addr %s194, 8
        %s196 = scalar_lea.vmem %s1, %s195
        %s197 = smul.u32 2, %s19
      $region24: #{weighted_categorical_cross_entropy.1} parent=15 // pred_fallthru
        _
    $region16: #{weighted_categorical_cross_entropy.1} parent=5 // pred_fallthru
      _
    %p198 = scmp.le.s32.totalorder 1, %s10
    %p199 = scmp.lt.s32.totalorder %s10, 9
    %p200 = pnand %p198, %p199
    %p201 = pneg %p200
    // Predicated region
    $region25: #{weighted_categorical_cross_entropy.1} parent=5 // pred_check
      _
    $region26: #{weighted_categorical_cross_entropy.1} parent=5 // pred_check_branch
      %203 = sbr.rel (%p200) target = $region28
    $region27: #{weighted_categorical_cross_entropy.1} parent=5 // pred_region
      %s204 = ssub.s32 %s10, 1
      %s205 = smul.u32 2, %s22
      %p206 = scmp.lt.s32.totalorder %s21, 1
      %s207 = scalar_select %p206, %s21, 1
      %p208 = scmp.lt.s32.totalorder %s20, 3
      %s209 = scalar_select %p208, %s20, 3
      %p210 = scmp.lt.s32.totalorder %s205, 1
      %s211 = scalar_select %p210, %s205, 1
      %s212 = smul.addr %s209, 2
      %s213 = sadd.s32 %s211, %s212
      %s214 = smul.addr %s207, 8
      %s215 = sadd.s32 %s213, %s214
      %s216 = smul.addr %s215, 8
      %s217 = scalar_lea.vmem %s0, %s216
      %p218 = pneg %p59
      %p219 = pneg %p56
      %s220 = smul.u32 2, %s22
      %p221 = scmp.lt.s32.totalorder %s21, 1
      %s222 = scalar_select %p221, %s21, 1
      %p223 = scmp.lt.s32.totalorder %s20, 3
      %s224 = scalar_select %p223, %s20, 3
      %p225 = scmp.lt.s32.totalorder %s220, 1
      %s226 = scalar_select %p225, %s220, 1
      %s227 = smul.addr %s224, 2
      %s228 = sadd.s32 %s226, %s227
      %s229 = smul.addr %s222, 8
      %s230 = sadd.s32 %s228, %s229
      %s231 = smul.addr %s230, 8
      %s232 = scalar_lea.vmem %s1, %s231
      %p233 = pneg %p89
      %p234 = pneg %p86
      %p235 = pneg %p117
      %p236 = pneg %p114
      %p237 = scmp.lt.s32.totalorder %s20, 3
      %s238 = scalar_select %p237, %s20, 3
      %p239 = scmp.lt.s32.totalorder %s21, 1
      %s240 = scalar_select %p239, %s21, 1
      %s241 = smul.addr %s238, 2
      %s242 = sadd.s32 %s240, %s241
      %s243 = smul.addr %s242, 8
      %s244 = scalar_lea.vmem %s2, %s243
      %p245 = pneg %p145
      %p246 = pneg %p142
      %p247 = scmp.lt.s32.totalorder %s20, 3
      %s248 = scalar_select %p247, %s20, 3
      %p249 = scmp.lt.s32.totalorder %s21, 1
      %s250 = scalar_select %p249, %s21, 1
      %s251 = smul.addr %s248, 2
      %s252 = sadd.s32 %s250, %s251
      %s253 = smul.addr %s252, 8
      %s254 = scalar_lea.vmem %s3, %s253
      %s255 = smul.u32 2, %s22
      %p256 = scmp.lt.s32.totalorder %s21, 1
      %s257 = scalar_select %p256, %s21, 1
      %p258 = scmp.lt.s32.totalorder %s20, 3
      %s259 = scalar_select %p258, %s20, 3
      %p260 = scmp.lt.s32.totalorder %s255, 1
      %s261 = scalar_select %p260, %s255, 1
      %s262 = smul.addr %s259, 2
      %s263 = sadd.s32 %s261, %s262
      %s264 = smul.addr %s257, 8
      %s265 = sadd.s32 %s263, %s264
      %s266 = smul.addr %s265, 8
      %s267 = scalar_lea.vmem %s0, %s266
      %s268 = smul.u32 2, %s22
      %s269 = smul.u32 2, %s22
      %p270 = scmp.lt.s32.totalorder %s21, 1
      %s271 = scalar_select %p270, %s21, 1
      %p272 = scmp.lt.s32.totalorder %s20, 3
      %s273 = scalar_select %p272, %s20, 3
      %p274 = scmp.lt.s32.totalorder %s269, 1
      %s275 = scalar_select %p274, %s269, 1
      %s276 = smul.addr %s273, 2
      %s277 = sadd.s32 %s275, %s276
      %s278 = smul.addr %s271, 8
      %s279 = sadd.s32 %s277, %s278
      %s280 = smul.addr %s279, 8
      %s281 = scalar_lea.vmem %s1, %s280
      %s282 = smul.u32 2, %s22
      %p283 = scmp.lt.s32.totalorder %s20, 3
      %s284 = scalar_select %p283, %s20, 3
      %p285 = scmp.lt.s32.totalorder %s21, 1
      %s286 = scalar_select %p285, %s21, 1
      %s287 = smul.addr %s284, 2
      %s288 = sadd.s32 %s286, %s287
      %s289 = smul.addr %s288, 8
      %s290 = scalar_lea.vmem %s2, %s289
      %p291 = scmp.lt.s32.totalorder %s20, 3
      %s292 = scalar_select %p291, %s20, 3
      %p293 = scmp.lt.s32.totalorder %s21, 1
      %s294 = scalar_select %p293, %s21, 1
      %s295 = smul.addr %s292, 2
      %s296 = sadd.s32 %s294, %s295
      %s297 = smul.addr %s296, 8
      %s298 = scalar_lea.vmem %s3, %s297
      %p299 = scmp.eq.s32.totalorder %s22, 0
      // Predicated region
      $region29: #{weighted_categorical_cross_entropy.1} parent=27 // pred_check
        %p300 = pneg %p299
      $region30: #{weighted_categorical_cross_entropy.1} parent=27 // pred_check_branch
        %302 = sbr.rel (%p300) target = $region32
      $region31: #{weighted_categorical_cross_entropy.1} parent=27 // pred_region
        %303 = vst [vmem:[%s290] sm:$0xff] 0.0
        %304 = vst [vmem:[%s298] sm:$0xff] 0.0
      $region32: #{weighted_categorical_cross_entropy.1} parent=27 // pred_fallthru
        _
      %v305 = vld [vmem:[%s281] sm:$0xff]
      %v306 = vld [vmem:[%s281 + $0x8] sm:$0xff]
      %v307 = vld [vmem:[%s267] sm:$0xff]
      %v308 = vld [vmem:[%s267 + $0x8] sm:$0xff]
      %v309 = vadd.f32 %v307, 1e-09
      %v310 = vadd.f32 %v308, 1e-09
      %v311 = vlog2.pop %v309
      %v312 = vmul.f32 %v311, 0.6931472
      %v313 = vlog2.pop %v310
      %v314 = vmul.f32 %v313, 0.6931472
      %v315 = vmul.f32 %v305, %v312
      %v316 = vmul.f32 %v306, %v314
      %v317 = vadd.f32 %v305, %v306
      %v318 = vadd.f32 %v315, %v316
      %v319 = vld [vmem:[%s290] sm:$0xff]
      %v320 = vadd.f32 %v319, %v317
      %321 = vst [vmem:[%s290] sm:$0xff] %v320
      %v322 = vld [vmem:[%s298] sm:$0xff]
      %v323 = vadd.f32 %v322, %v318
      %324 = vst [vmem:[%s298] sm:$0xff] %v323
      %p325 = scmp.lt.s32.totalorder %s20, 3
      %s326 = scalar_select %p325, %s20, 3
      %p327 = scmp.lt.s32.totalorder %s21, 1
      %s328 = scalar_select %p327, %s21, 1
      %s329 = smul.addr %s326, 2
      %s330 = sadd.s32 %s328, %s329
      %s331 = smul.addr %s330, 8
      %s332 = scalar_lea.vmem %s2, %s331
      %p333 = scmp.lt.s32.totalorder %s20, 3
      %s334 = scalar_select %p333, %s20, 3
      %p335 = scmp.lt.s32.totalorder %s21, 1
      %s336 = scalar_select %p335, %s21, 1
      %s337 = smul.addr %s334, 2
      %s338 = sadd.s32 %s336, %s337
      %s339 = smul.addr %s338, 8
      %s340 = scalar_lea.vmem %s3, %s339
      // Predicated region
      $region33: #{weighted_categorical_cross_entropy.1} parent=27 // pred_check
        %p341 = pneg %p114
      $region34: #{weighted_categorical_cross_entropy.1} parent=27 // pred_check_branch
        %343 = sbr.rel (%p341) target = $region36
      $region35: #{weighted_categorical_cross_entropy.1} parent=27 // pred_region
        _
      $region36: #{weighted_categorical_cross_entropy.1} parent=27 // pred_fallthru
        _
      // Predicated region
      $region37: #{weighted_categorical_cross_entropy.1} parent=27 // pred_check
        %p344 = pneg %p142
      $region38: #{weighted_categorical_cross_entropy.1} parent=27 // pred_check_branch
        %346 = sbr.rel (%p344) target = $region40
      $region39: #{weighted_categorical_cross_entropy.1} parent=27 // pred_region
        _
      $region40: #{weighted_categorical_cross_entropy.1} parent=27 // pred_fallthru
        _
    $region28: #{weighted_categorical_cross_entropy.1} parent=5 // pred_fallthru
      _
    %p347 = scmp.le.s32.totalorder 2, %s10
    // Predicated region
    $region41: #{weighted_categorical_cross_entropy.1} parent=5 // pred_check
      %p348 = pneg %p347
    $region42: #{weighted_categorical_cross_entropy.1} parent=5 // pred_check_branch
      %350 = sbr.rel (%p348) target = $region44
    $region43: #{weighted_categorical_cross_entropy.1} parent=5 // pred_region
      %s351 = ssub.s32 %s10, 2
      // Predicated region
      $region45: #{weighted_categorical_cross_entropy.1} parent=43 // pred_check
        %p352 = pneg %p120
      $region46: #{weighted_categorical_cross_entropy.1} parent=43 // pred_check_branch
        %354 = sbr.rel (%p352) target = $region48
      $region47: #{weighted_categorical_cross_entropy.1} parent=43 // pred_region
        %p355 = scmp.lt.s32.totalorder %s23, 3
        %s356 = scalar_select %p355, %s23, 3
        %p357 = scmp.lt.s32.totalorder %s24, 1
        %s358 = scalar_select %p357, %s24, 1
        %s359 = smul.addr %s356, 2
        %s360 = sadd.s32 %s358, %s359
        %s361 = smul.addr %s360, 8
        %s362 = scalar_lea.vmem %s2, %s361
      $region48: #{weighted_categorical_cross_entropy.1} parent=43 // pred_fallthru
        _
      // Predicated region
      $region49: #{weighted_categorical_cross_entropy.1} parent=43 // pred_check
        %p363 = pneg %p148
      $region50: #{weighted_categorical_cross_entropy.1} parent=43 // pred_check_branch
        %365 = sbr.rel (%p363) target = $region52
      $region51: #{weighted_categorical_cross_entropy.1} parent=43 // pred_region
        %p366 = scmp.lt.s32.totalorder %s23, 3
        %s367 = scalar_select %p366, %s23, 3
        %p368 = scmp.lt.s32.totalorder %s24, 1
        %s369 = scalar_select %p368, %s24, 1
        %s370 = smul.addr %s367, 2
        %s371 = sadd.s32 %s369, %s370
        %s372 = smul.addr %s371, 8
        %s373 = scalar_lea.vmem %s3, %s372
      $region52: #{weighted_categorical_cross_entropy.1} parent=43 // pred_fallthru
        _
    $region44: #{weighted_categorical_cross_entropy.1} parent=5 // pred_fallthru
      _
  $region6: #{weighted_categorical_cross_entropy.1} parent=0 // loop_footer
    %s14 = sadd.s32 1, %s10
  $region7: #{weighted_categorical_cross_entropy.1} parent=0 // loop_footer_branch
    %9 = sbr.rel target = $region3
  $region8: #{weighted_categorical_cross_entropy.1} parent=0 // loop_exit
    _

</llo_original>
